<compile_context>
chip_gen: v6e
topology: v6e:2x2x1
jax: 0.10.0
libtpu: 0.0.40
codegen_flags: <defaults>
</compile_context>

<pallas_src>
import functools

import jax
import jax.numpy as jnp
from jax.experimental import pallas as pl
from jax.experimental.pallas import tpu as pltpu


def _round_up(v: int, m: int) -> int:
    return (v + m - 1) // m * m


def _make_mlp_flow_kernel(n_layers: int, leaky: float, output_fn, score_scale,
                          output_scale, d_in: int, d_out: int, pad_in: bool):
    """Kernel closing over the static network structure.

    Ref order: x_ref, w0, b0, ..., w_{L-1}, b_{L-1}, out_ref [, xpad_scratch]
      x_ref : (tm, d_in)            native-width input tile
      w_k   : (pdims[k], pdims[k+1]) zero-padded, pre-transposed weight (resident)
      b_k   : (1, pdims[k+1])        zero-padded bias (resident)
      out   : (tm, d_out)            native-width output tile
      xpad  : (tm, pdims[0]) f32     lane-padding scratch (only if d_in % 128 != 0)
    """

    def kernel(*refs):
        x_ref = refs[0]
        out_ref = refs[1 + 2 * n_layers]

        if pad_in:
            xpad = refs[2 + 2 * n_layers]
            # Zero every grid step (NOT gated on program_id==0): on v7x megacore each core
            # has its own scratch, and only one of them runs step 0.  Cost is trivial.
            xpad[...] = jnp.zeros_like(xpad)
            xpad[:, :d_in] = x_ref[...].astype(jnp.float32)
            h = xpad[...]
        else:
            h = x_ref[...].astype(jnp.float32)

        for k in range(n_layers):
            w = refs[1 + 2 * k][...]
            b = refs[2 + 2 * k][...]
            h = jnp.dot(h, w, preferred_element_type=jnp.float32) + b
            if k < n_layers - 1:
                if leaky == 0.0:
                    h = jnp.maximum(h, 0.0)          # ReLU (default LeakyReLU(0.0))
                else:
                    h = jnp.where(h >= 0.0, h, leaky * h)

        # Drop padded lanes before the (optional) output head and the narrow HBM store.
        if h.shape[-1] != d_out:
            h = h[:, :d_out]

        if output_fn is not None:
            if score_scale is not None:
                h = h * jnp.float32(score_scale)
            if output_fn == "sigmoid":
                h = jax.nn.sigmoid(h)
            elif output_fn == "relu":
                h = jnp.maximum(h, 0.0)
            elif output_fn == "tanh":
                h = jnp.tanh(h)
            elif output_fn == "clampexp":
                h = jnp.minimum(jnp.exp(h), 1.0)
            if output_scale is not None:
                h = h * jnp.float32(output_scale)

        out_ref[...] = h.astype(out_ref.dtype)

    return kernel


def pack_mlp_flow_params(weights, biases):
    """Pad (to 128 lanes) and transpose PyTorch-convention weights ONCE.

    weights[k]: (out_features, in_features), biases[k]: (out_features,).
    Returns (packed_params_tuple, dims_tuple).  Do this outside the hot loop.
    """
    n_layers = len(weights)
    dims = tuple([weights[0].shape[1]] + [w.shape[0] for w in weights])
    pdims = [_round_up(d, 128) for d in dims]
    packed = []
    for k in range(n_layers):
        wt = jnp.zeros((pdims[k], pdims[k + 1]), jnp.float32)
        wt = wt.at[:dims[k], :dims[k + 1]].set(jnp.asarray(weights[k], jnp.float32).T)
        bp = jnp.zeros((1, pdims[k + 1]), jnp.float32)
        bp = bp.at[0, :dims[k + 1]].set(jnp.asarray(biases[k], jnp.float32))
        packed += [wt, bp]
    return tuple(packed), dims


@functools.partial(
    jax.jit,
    static_argnames=("dims", "leaky", "output_fn", "score_scale", "output_scale",
                     "block_rows"),
)
def _mlp_flow_forward_2d(x2d, packed, *, dims, leaky, output_fn, score_scale,
                         output_scale, block_rows):
    n_layers = len(dims) - 1
    d_in, d_out = dims[0], dims[-1]
    pdims = tuple(_round_up(d, 128) for d in dims)
    pad_in = pdims[0] != d_in
    assert x2d.shape[1] == d_in, "input feature dim mismatch"

    N = x2d.shape[0]
    n8 = _round_up(max(N, 1), 8)
    # Row tile: multiple of 8 (defensive round-up of block_rows), capped to the batch.
    tm = min(max(_round_up(block_rows, 8), 8), n8)
    # Ensure >= 2 grid steps when possible so the "parallel" axis can shard across
    # v7x's two TensorCores (also reduces row-padding waste on all generations).
    if n8 > 8:
        tm = min(tm, _round_up((n8 + 1) // 2, 8))
    n_pad = _round_up(n8, tm)
    grid = (n_pad // tm,)

    # Only row padding (to a multiple of tm) in HBM -- feature width stays native.
    x_p = jnp.pad(x2d, ((0, n_pad - N), (0, 0))) if n_pad != N else x2d

    in_specs = [pl.BlockSpec((tm, d_in), lambda i: (i, 0))]
    for k in range(n_layers):
        in_specs.append(pl.BlockSpec((pdims[k], pdims[k + 1]), lambda i: (0, 0)))  # resident
        in_specs.append(pl.BlockSpec((1, pdims[k + 1]), lambda i: (0, 0)))         # resident
    scratch_shapes = [pltpu.VMEM((tm, pdims[0]), jnp.float32)] if pad_in else []

    kernel = _make_mlp_flow_kernel(n_layers, float(leaky), output_fn, score_scale,
                                   output_scale, d_in, d_out, pad_in)

    out_p = pl.pallas_call(
        kernel,
        out_shape=jax.ShapeDtypeStruct((n_pad, d_out), x2d.dtype),
        grid=grid,
        in_specs=in_specs,
        out_specs=pl.BlockSpec((tm, d_out), lambda i: (i, 0)),
        scratch_shapes=scratch_shapes,
        compiler_params=pltpu.CompilerParams(
            # Megacore-shardable row-tile axis on v7x; no-op on v5e/v6e.
            dimension_semantics=("parallel",),
            # Default scoped VMEM limit is ample here (~2 MiB/step at tm=512); raise
            # vmem_limit_bytes only if sweeping tm past ~2048 on v5e.
        ),
    )(x_p, *packed)

    return out_p[:N]


def mlp_flow_forward(x, packed_params, dims, *, leaky: float = 0.0, output_fn=None,
                     score_scale=None, output_scale=None, block_rows: int = 512):
    """MLP_flow.forward(x) using pre-packed params from pack_mlp_flow_params."""
    squeeze = x.ndim == 1
    x2d = x[None, :] if squeeze else x
    out = _mlp_flow_forward_2d(
        x2d, packed_params,
        dims=tuple(int(d) for d in dims),
        leaky=float(leaky),
        output_fn=output_fn,
        score_scale=None if score_scale is None else float(score_scale),
        output_scale=None if output_scale is None else float(output_scale),
        block_rows=int(block_rows),
    )
    return out[0] if squeeze else out


def _mlp_flow_ref(x, weights, biases, *, leaky=0.0, output_fn=None,
                  score_scale=None, output_scale=None):
    """Pure-JAX reference mirroring the PyTorch module."""
    h = jnp.atleast_2d(x).astype(jnp.float32)
    for k, (w, b) in enumerate(zip(weights, biases)):
        h = h @ w.T.astype(jnp.float32) + b.astype(jnp.float32)
        if k < len(weights) - 1:
            h = jnp.where(h >= 0.0, h, leaky * h)
    if output_fn is not None:
        if score_scale is not None:
            h = h * score_scale
        if output_fn == "sigmoid":
            h = jax.nn.sigmoid(h)
        elif output_fn == "relu":
            h = jnp.maximum(h, 0.0)
        elif output_fn == "tanh":
            h = jnp.tanh(h)
        elif output_fn == "clampexp":
            h = jnp.minimum(jnp.exp(h), 1.0)
        if output_scale is not None:
            h = h * output_scale
    h = h.astype(x.dtype)
    return h[0] if x.ndim == 1 else h


if __name__ == "__main__":
    # MLP_flow(layers=[2, 4, 4, 2]) -- matches the module docstring example -- on a small batch.
    layers = [2, 4, 4, 2]
    batch = 8
    key = jax.random.PRNGKey(0)
    keys = jax.random.split(key, 2 * (len(layers) - 1) + 2)

    # PyTorch-default-like Linear init: U(-1/sqrt(fan_in), 1/sqrt(fan_in)).
    weights, biases = [], []
    for k in range(len(layers) - 1):
        fan_in, fan_out = layers[k], layers[k + 1]
        bound = 1.0 / (fan_in ** 0.5)
        weights.append(jax.random.uniform(keys[2 * k], (fan_out, fan_in),
                                          jnp.float32, -bound, bound))
        biases.append(jax.random.uniform(keys[2 * k + 1], (fan_out,),
                                         jnp.float32, -bound, bound))

    # Pack (pad + transpose) the parameters ONCE; reuse across forward calls.
    packed, dims = pack_mlp_flow_params(weights, biases)

    x = jax.random.normal(keys[-2], (batch, layers[0]), dtype=jnp.float32)

    # Default configuration (leaky=0.0 -> ReLU, no dropout, no output_fn).
    y = jax.block_until_ready(mlp_flow_forward(x, packed, dims))
    y_ref = _mlp_flow_ref(x, weights, biases)
    assert y.shape == (batch, layers[-1])
    assert jnp.allclose(y, y_ref, atol=1e-5, rtol=1e-5)

    # 1-D input (the module docstring example shape).
    x1 = jnp.array([1.0, 2.0], dtype=jnp.float32)
    y1 = jax.block_until_ready(mlp_flow_forward(x1, packed, dims))
    assert y1.shape == (layers[-1],)
    assert jnp.allclose(y1, _mlp_flow_ref(x1, weights, biases), atol=1e-5, rtol=1e-5)

    # Multi-tile path (grid >= 2 steps: the layout v7x megacore sharding needs).
    x_big = jax.random.normal(keys[-1], (24, layers[0]), dtype=jnp.float32)
    y_big = jax.block_until_ready(mlp_flow_forward(x_big, packed, dims, block_rows=8))
    assert jnp.allclose(y_big, _mlp_flow_ref(x_big, weights, biases), atol=1e-5, rtol=1e-5)

    # Optional output head: output_scale * tanh(score_scale * out).
    y_fn = jax.block_until_ready(
        mlp_flow_forward(x, packed, dims, output_fn="tanh",
                         score_scale=2.0, output_scale=0.5))
    y_fn_ref = _mlp_flow_ref(x, weights, biases, output_fn="tanh",
                             score_scale=2.0, output_scale=0.5)
    assert jnp.allclose(y_fn, y_fn_ref, atol=1e-5, rtol=1e-5)

    print("KERNEL_OK")
</pallas_src>

<mosaic_0001>
module attributes {stable_mosaic.version = 11 : i64} {
  func.func @kernel(%arg0: i32, %arg1: memref<8x2xf32, #tpu.memory_space<vmem>>, %arg2: memref<128x128xf32, #tpu.memory_space<vmem>>, %arg3: memref<1x128xf32, #tpu.memory_space<vmem>>, %arg4: memref<128x128xf32, #tpu.memory_space<vmem>>, %arg5: memref<1x128xf32, #tpu.memory_space<vmem>>, %arg6: memref<128x128xf32, #tpu.memory_space<vmem>>, %arg7: memref<1x128xf32, #tpu.memory_space<vmem>>, %arg8: memref<8x2xf32, #tpu.memory_space<vmem>>, %arg9: memref<8x128xf32, #tpu.memory_space<vmem>>) attributes {dimension_semantics = [#tpu.dimension_semantics<parallel>], iteration_bounds = array<i64: 1>, scalar_prefetch = 0 : i64, scratch_operands = 1 : i64, tpu.core_type = #tpu.core_type<tc>, window_params = [{transform_indices = @transform_0, window_bounds = array<i64: 8, 2>}, {pipeline_mode = #tpu.pipeline_mode<synchronous>, transform_indices = @transform_1, window_bounds = array<i64: 128, 128>}, {pipeline_mode = #tpu.pipeline_mode<synchronous>, transform_indices = @transform_2, window_bounds = array<i64: 1, 128>}, {pipeline_mode = #tpu.pipeline_mode<synchronous>, transform_indices = @transform_3, window_bounds = array<i64: 128, 128>}, {pipeline_mode = #tpu.pipeline_mode<synchronous>, transform_indices = @transform_4, window_bounds = array<i64: 1, 128>}, {pipeline_mode = #tpu.pipeline_mode<synchronous>, transform_indices = @transform_5, window_bounds = array<i64: 128, 128>}, {pipeline_mode = #tpu.pipeline_mode<synchronous>, transform_indices = @transform_6, window_bounds = array<i64: 1, 128>}, {transform_indices = @transform_7, window_bounds = array<i64: 8, 2>}]} {
    %cst = arith.constant 0.000000e+00 : f32
    %0 = vector.broadcast %cst : f32 to vector<8x128xf32>
    %c0 = arith.constant 0 : index
    %c0_0 = arith.constant 0 : index
    %1 = vector.load %arg9[%c0, %c0_0] : memref<8x128xf32, #tpu.memory_space<vmem>>, vector<8x128xf32>
    tpu.vector_store %arg9[%c0, %c0_0], %0 {strides = array<i32>} : memref<8x128xf32, #tpu.memory_space<vmem>>, vector<8x128xf32>,
    %c0_1 = arith.constant 0 : index
    %c0_2 = arith.constant 0 : index
    %2 = vector.load %arg1[%c0_1, %c0_2] : memref<8x2xf32, #tpu.memory_space<vmem>>, vector<8x2xf32>
    %c0_3 = arith.constant 0 : index
    %c0_4 = arith.constant 0 : index
    %3 = vector.load %arg9[%c0_3, %c0_4] : memref<8x128xf32, #tpu.memory_space<vmem>>, vector<8x2xf32>
    tpu.vector_store %arg9[%c0_3, %c0_4], %2 {strides = array<i32>} : memref<8x128xf32, #tpu.memory_space<vmem>>, vector<8x2xf32>,
    %c0_5 = arith.constant 0 : index
    %c0_6 = arith.constant 0 : index
    %4 = vector.load %arg9[%c0_5, %c0_6] : memref<8x128xf32, #tpu.memory_space<vmem>>, vector<8x128xf32>
    %c0_7 = arith.constant 0 : index
    %c0_8 = arith.constant 0 : index
    %5 = vector.load %arg2[%c0_7, %c0_8] : memref<128x128xf32, #tpu.memory_space<vmem>>, vector<128x128xf32>
    %c0_9 = arith.constant 0 : index
    %c0_10 = arith.constant 0 : index
    %6 = vector.load %arg3[%c0_9, %c0_10] : memref<1x128xf32, #tpu.memory_space<vmem>>, vector<1x128xf32>
    %cst_11 = arith.constant dense<0.000000e+00> : vector<8x128xf32>
    %7 = tpu.matmul %4, %5, %cst_11 {dimension_numbers = #tpu.dot_dimension_numbers<[1], [0], [0], [1], [0, 0, 1, 1], [], []>} : vector<8x128xf32>, vector<128x128xf32>, vector<8x128xf32> -> vector<8x128xf32>
    %8 = vector.broadcast %6 : vector<1x128xf32> to vector<8x128xf32>
    %9 = arith.addf %7, %8 : vector<8x128xf32>
    %cst_12 = arith.constant 0.000000e+00 : f32
    %10 = vector.broadcast %cst_12 : f32 to vector<8x128xf32>
    %11 = arith.maximumf %9, %10 : vector<8x128xf32>
    %c0_13 = arith.constant 0 : index
    %c0_14 = arith.constant 0 : index
    %12 = vector.load %arg4[%c0_13, %c0_14] : memref<128x128xf32, #tpu.memory_space<vmem>>, vector<128x128xf32>
    %c0_15 = arith.constant 0 : index
    %c0_16 = arith.constant 0 : index
    %13 = vector.load %arg5[%c0_15, %c0_16] : memref<1x128xf32, #tpu.memory_space<vmem>>, vector<1x128xf32>
    %cst_17 = arith.constant dense<0.000000e+00> : vector<8x128xf32>
    %14 = tpu.matmul %11, %12, %cst_17 {dimension_numbers = #tpu.dot_dimension_numbers<[1], [0], [0], [1], [0, 0, 1, 1], [], []>} : vector<8x128xf32>, vector<128x128xf32>, vector<8x128xf32> -> vector<8x128xf32>
    %15 = vector.broadcast %13 : vector<1x128xf32> to vector<8x128xf32>
    %16 = arith.addf %14, %15 : vector<8x128xf32>
    %cst_18 = arith.constant 0.000000e+00 : f32
    %17 = vector.broadcast %cst_18 : f32 to vector<8x128xf32>
    %18 = arith.maximumf %16, %17 : vector<8x128xf32>
    %c0_19 = arith.constant 0 : index
    %c0_20 = arith.constant 0 : index
    %19 = vector.load %arg6[%c0_19, %c0_20] : memref<128x128xf32, #tpu.memory_space<vmem>>, vector<128x128xf32>
    %c0_21 = arith.constant 0 : index
    %c0_22 = arith.constant 0 : index
    %20 = vector.load %arg7[%c0_21, %c0_22] : memref<1x128xf32, #tpu.memory_space<vmem>>, vector<1x128xf32>
    %cst_23 = arith.constant dense<0.000000e+00> : vector<8x128xf32>
    %21 = tpu.matmul %18, %19, %cst_23 {dimension_numbers = #tpu.dot_dimension_numbers<[1], [0], [0], [1], [0, 0, 1, 1], [], []>} : vector<8x128xf32>, vector<128x128xf32>, vector<8x128xf32> -> vector<8x128xf32>
    %22 = vector.broadcast %20 : vector<1x128xf32> to vector<8x128xf32>
    %23 = arith.addf %21, %22 : vector<8x128xf32>
    %24 = vector.extract_strided_slice %23 {offsets = [0, 0], sizes = [8, 2], strides = [1, 1]} : vector<8x128xf32> to vector<8x2xf32>
    %c0_24 = arith.constant 0 : index
    %c0_25 = arith.constant 0 : index
    %25 = vector.load %arg8[%c0_24, %c0_25] : memref<8x2xf32, #tpu.memory_space<vmem>>, vector<8x2xf32>
    tpu.vector_store %arg8[%c0_24, %c0_25], %24 {strides = array<i32>} : memref<8x2xf32, #tpu.memory_space<vmem>>, vector<8x2xf32>,
    return
  }
  func.func @transform_0(%arg0: i32) -> (i32, i32) {
    %c0_i32 = arith.constant 0 : i32
    %c0_i32_0 = arith.constant 0 : i32
    return %arg0, %c0_i32 : i32, i32
  }
  func.func @transform_1(%arg0: i32) -> (i32, i32) {
    %c0_i32 = arith.constant 0 : i32
    %c0_i32_0 = arith.constant 0 : i32
    %c0_i32_1 = arith.constant 0 : i32
    return %c0_i32, %c0_i32_0 : i32, i32
  }
  func.func @transform_2(%arg0: i32) -> (i32, i32) {
    %c0_i32 = arith.constant 0 : i32
    %c0_i32_0 = arith.constant 0 : i32
    %c0_i32_1 = arith.constant 0 : i32
    return %c0_i32, %c0_i32_0 : i32, i32
  }
  func.func @transform_3(%arg0: i32) -> (i32, i32) {
    %c0_i32 = arith.constant 0 : i32
    %c0_i32_0 = arith.constant 0 : i32
    %c0_i32_1 = arith.constant 0 : i32
    return %c0_i32, %c0_i32_0 : i32, i32
  }
  func.func @transform_4(%arg0: i32) -> (i32, i32) {
    %c0_i32 = arith.constant 0 : i32
    %c0_i32_0 = arith.constant 0 : i32
    %c0_i32_1 = arith.constant 0 : i32
    return %c0_i32, %c0_i32_0 : i32, i32
  }
  func.func @transform_5(%arg0: i32) -> (i32, i32) {
    %c0_i32 = arith.constant 0 : i32
    %c0_i32_0 = arith.constant 0 : i32
    %c0_i32_1 = arith.constant 0 : i32
    return %c0_i32, %c0_i32_0 : i32, i32
  }
  func.func @transform_6(%arg0: i32) -> (i32, i32) {
    %c0_i32 = arith.constant 0 : i32
    %c0_i32_0 = arith.constant 0 : i32
    %c0_i32_1 = arith.constant 0 : i32
    return %c0_i32, %c0_i32_0 : i32, i32
  }
  func.func @transform_7(%arg0: i32) -> (i32, i32) {
    %c0_i32 = arith.constant 0 : i32
    %c0_i32_0 = arith.constant 0 : i32
    return %arg0, %c0_i32 : i32, i32
  }
}

</mosaic_0001>

<llo_original>
// kernel: _mlp_flow_forward_2d.1
$region0: #{_mlp_flow_forward_2d.1}
  #allocation0 [shape = 'u32[]', space=smem, size = 0x4, offset = 0x4, fixed_abs, tag = 'smem constant byte address 0x4 - core index']
  #allocation1 [shape = 'u32[144,128]{1,0:T(1,128)}', space=vmem, size = 0x12000, scoped, tag = 'internal scratch']
  #allocation2 [shape = 'f32[8,128]{1,0:T(8,128)}', space=vmem, size = 0x1000, scoped, tag = 'scratch operand']
  %s0 = inlined_call_operand.vmem [shape: f32[8,2], index: 0, kind: input, shape index: {}]
  %s1 = inlined_call_operand.hbm [shape: f32[128,128], index: 1, kind: input, shape index: {}]
  %s2 = inlined_call_operand.vmem [shape: f32[1,128], index: 2, kind: input, shape index: {}]
  %s3 = inlined_call_operand.hbm [shape: f32[128,128], index: 3, kind: input, shape index: {}]
  %s4 = inlined_call_operand.vmem [shape: f32[1,128], index: 4, kind: input, shape index: {}]
  %s5 = inlined_call_operand.hbm [shape: f32[128,128], index: 5, kind: input, shape index: {}]
  %s6 = inlined_call_operand.vmem [shape: f32[1,128], index: 6, kind: input, shape index: {}]
  %s7 = inlined_call_operand.vmem [shape: f32[8,2], index: 7, kind: output, shape index: {}]
  %s8 = sld [smem:[#allocation0]]
  $region50: #{_mlp_flow_forward_2d.1} parent=0
    _
  %s10 = ssub.s32 1, %s8
  %s11 = scalar_select 0, %s10, %s8
  $region1: #{_mlp_flow_forward_2d.1} parent=0
    #allocation3 [shape = 'u8[65536]{0}', space=vmem, size = 0x10000, scoped, tag = 'input window, operand 1, single buffered']
    #allocation4 [shape = 's32[1]{0}', space=sflag, size = 0x4, scoped, tag = 'scoped memory for _mlp_flow_forward_2d.1']
    #allocation5 [shape = 'u8[65536]{0}', space=vmem, size = 0x10000, scoped, tag = 'input window, operand 3, single buffered']
    #allocation6 [shape = 's32[1]{0}', space=sflag, size = 0x4, scoped, tag = 'scoped memory for _mlp_flow_forward_2d.1']
    #allocation7 [shape = 'u8[65536]{0}', space=vmem, size = 0x10000, scoped, tag = 'input window, operand 5, single buffered']
    %12 = vsyncpa [#allocation4], 0
    %13 = vsyncpa [#allocation6], 0
    // Predicated region
    $region2: #{_mlp_flow_forward_2d.1} parent=1 // pred_check
      _
    $region3: #{_mlp_flow_forward_2d.1} parent=1 // pred_check_branch
      %15 = sbr.rel (0) target = $region5
    $region4: #{_mlp_flow_forward_2d.1} parent=1 // pred_region
      _
    $region5: #{_mlp_flow_forward_2d.1} parent=1 // pred_fallthru
      _
    // Predicated region
    $region6: #{_mlp_flow_forward_2d.1} parent=1 // pred_check
      _
    $region7: #{_mlp_flow_forward_2d.1} parent=1 // pred_check_branch
      %17 = sbr.rel (0) target = $region9
    $region8: #{_mlp_flow_forward_2d.1} parent=1 // pred_region
      %s19 = ssub.s32 2048, 2048
      %20 = vsyncadd [#allocation4], %s19
      %s21 = sshll.u32 [#allocation3], 4
      %s22 = int_to_ptr.vmem [resolvable:$true] %s21
      %27 = dma.hbm_to_vmem [thread:$0]  %s1, 2048, %s22, [#allocation4], 128, 128, 8
    $region9: #{_mlp_flow_forward_2d.1} parent=1 // pred_fallthru
      _
    // Predicated region
    $region10: #{_mlp_flow_forward_2d.1} parent=1 // pred_check
      _
    $region11: #{_mlp_flow_forward_2d.1} parent=1 // pred_check_branch
      %29 = sbr.rel (0) target = $region13
    $region12: #{_mlp_flow_forward_2d.1} parent=1 // pred_region
      _
    $region13: #{_mlp_flow_forward_2d.1} parent=1 // pred_fallthru
      _
    // Predicated region
    $region14: #{_mlp_flow_forward_2d.1} parent=1 // pred_check
      _
    $region15: #{_mlp_flow_forward_2d.1} parent=1 // pred_check_branch
      %31 = sbr.rel (0) target = $region17
    $region16: #{_mlp_flow_forward_2d.1} parent=1 // pred_region
      %s33 = ssub.s32 2048, 2048
      %34 = vsyncadd [#allocation6], %s33
      %s35 = sshll.u32 [#allocation5], 4
      %s36 = int_to_ptr.vmem [resolvable:$true] %s35
      %41 = dma.hbm_to_vmem [thread:$0]  %s3, 2048, %s36, [#allocation6], 128, 128, 8
    $region17: #{_mlp_flow_forward_2d.1} parent=1 // pred_fallthru
      _
    // Predicated region
    $region18: #{_mlp_flow_forward_2d.1} parent=1 // pred_check
      _
    $region19: #{_mlp_flow_forward_2d.1} parent=1 // pred_check_branch
      %43 = sbr.rel (0) target = $region21
    $region20: #{_mlp_flow_forward_2d.1} parent=1 // pred_region
      _
    $region21: #{_mlp_flow_forward_2d.1} parent=1 // pred_fallthru
      _
    // Predicated region
    $region22: #{_mlp_flow_forward_2d.1} parent=1 // pred_check
      _
    $region23: #{_mlp_flow_forward_2d.1} parent=1 // pred_check_branch
      %45 = sbr.rel (0) target = $region25
    $region24: #{_mlp_flow_forward_2d.1} parent=1 // pred_region
      %s47 = ssub.s32 2048, 2048
      %48 = vsyncadd [#allocation6], %s47
      %s49 = sshll.u32 [#allocation7], 4
      %s50 = int_to_ptr.vmem [resolvable:$true] %s49
      %55 = dma.hbm_to_vmem [thread:$0]  %s5, 2048, %s50, [#allocation6], 128, 128, 8
    $region25: #{_mlp_flow_forward_2d.1} parent=1 // pred_fallthru
      _
    // Predicated region
    $region26: #{_mlp_flow_forward_2d.1} parent=1 // pred_check
      _
    $region27: #{_mlp_flow_forward_2d.1} parent=1 // pred_check_branch
      %57 = sbr.rel (0) target = $region29
    $region28: #{_mlp_flow_forward_2d.1} parent=1 // pred_region
      _
    $region29: #{_mlp_flow_forward_2d.1} parent=1 // pred_fallthru
      _
    // Predicated region
    $region30: #{_mlp_flow_forward_2d.1} parent=1 // pred_check
      _
    $region31: #{_mlp_flow_forward_2d.1} parent=1 // pred_check_branch
      %59 = sbr.rel (0) target = $region33
    $region32: #{_mlp_flow_forward_2d.1} parent=1 // pred_region
      %60 = dma.done [#allocation4], 2048
    $region33: #{_mlp_flow_forward_2d.1} parent=1 // pred_fallthru
      _
    // Predicated region
    $region34: #{_mlp_flow_forward_2d.1} parent=1 // pred_check
      _
    $region35: #{_mlp_flow_forward_2d.1} parent=1 // pred_check_branch
      %62 = sbr.rel (0) target = $region37
    $region36: #{_mlp_flow_forward_2d.1} parent=1 // pred_region
      %63 = dma.done [#allocation6], 2048
    $region37: #{_mlp_flow_forward_2d.1} parent=1 // pred_fallthru
      _
    // Predicated region
    $region38: #{_mlp_flow_forward_2d.1} parent=1 // pred_check
      _
    $region39: #{_mlp_flow_forward_2d.1} parent=1 // pred_check_branch
      %65 = sbr.rel (0) target = $region41
    $region40: #{_mlp_flow_forward_2d.1} parent=1 // pred_region
      %66 = dma.done [#allocation6], 2048
    $region41: #{_mlp_flow_forward_2d.1} parent=1 // pred_fallthru
      _
    %67 = vst [vmem:[#allocation2] sm:$0xff] 0.0
    %v68 = vld [vmem:[%s0] sm:$0xff]
    %vm69 = vcmask 15360
    %70 = vst.msk [vmem:[#allocation2] sm:$0xff] %vm69, %v68
    %v71 = vld [vmem:[#allocation2] sm:$0xff]
    %v72 = vld [vmem:[#allocation3] sm:$0xff]
    %v73 = vld [vmem:[#allocation3 + $0x8] sm:$0xff]
    %v74 = vld [vmem:[#allocation3 + $0x10] sm:$0xff]
    %v75 = vld [vmem:[#allocation3 + $0x18] sm:$0xff]
    %v76 = vld [vmem:[#allocation3 + $0x20] sm:$0xff]
    %v77 = vld [vmem:[#allocation3 + $0x28] sm:$0xff]
    %v78 = vld [vmem:[#allocation3 + $0x30] sm:$0xff]
    %v79 = vld [vmem:[#allocation3 + $0x38] sm:$0xff]
    %v80 = vld [vmem:[#allocation3 + $0x40] sm:$0xff]
    %v81 = vld [vmem:[#allocation3 + $0x48] sm:$0xff]
    %v82 = vld [vmem:[#allocation3 + $0x50] sm:$0xff]
    %v83 = vld [vmem:[#allocation3 + $0x58] sm:$0xff]
    %v84 = vld [vmem:[#allocation3 + $0x60] sm:$0xff]
    %v85 = vld [vmem:[#allocation3 + $0x68] sm:$0xff]
    %v86 = vld [vmem:[#allocation3 + $0x70] sm:$0xff]
    %v87 = vld [vmem:[#allocation3 + $0x78] sm:$0xff]
    %v88 = vld [vmem:[%s2] sm:$0x1]
    %v90 = vlaneseq
    %v91 = vshrl.u32 %v90, 7
    %v92 = vsub.s32 0, %v91
    %v93 = vrot.slane %v88, %v92
    %95 = vmatprep.subr.mxu0 0.0
    %96 = vmatpush1.msra.mxu0 %v87
    %97 = vmatprep.subr.mxu0 0.0
    %98 = vmatpush1.msra.mxu0 %v86
    %99 = vmatprep.subr.mxu0 0.0
    %100 = vmatpush1.msra.mxu0 %v85
    %101 = vmatprep.subr.mxu0 0.0
    %102 = vmatpush1.msra.mxu0 %v84
    %103 = vmatprep.subr.mxu0 0.0
    %104 = vmatpush1.msra.mxu0 %v83
    %105 = vmatprep.subr.mxu0 0.0
    %106 = vmatpush1.msra.mxu0 %v82
    %107 = vmatprep.subr.mxu0 0.0
    %108 = vmatpush1.msra.mxu0 %v81
    %109 = vmatprep.subr.mxu0 0.0
    %110 = vmatpush1.msra.mxu0 %v80
    %111 = vmatprep.subr.mxu0 0.0
    %112 = vmatpush1.msra.mxu0 %v79
    %113 = vmatprep.subr.mxu0 0.0
    %114 = vmatpush1.msra.mxu0 %v78
    %115 = vmatprep.subr.mxu0 0.0
    %116 = vmatpush1.msra.mxu0 %v77
    %117 = vmatprep.subr.mxu0 0.0
    %118 = vmatpush1.msra.mxu0 %v76
    %119 = vmatprep.subr.mxu0 0.0
    %120 = vmatpush1.msra.mxu0 %v75
    %121 = vmatprep.subr.mxu0 0.0
    %122 = vmatpush1.msra.mxu0 %v74
    %123 = vmatprep.subr.mxu0 0.0
    %124 = vmatpush1.msra.mxu0 %v73
    %125 = vmatprep.subr.mxu0 0.0
    %126 = vmatpush1.msra.mxu0 %v72
    %127 = vmatprep.subr.mxu0 0.0
    %128 = vmatpush2.msra.mxu0 0.0
    %129 = vmatprep.subr.mxu0 0.0
    %130 = vmatpush2.msra.mxu0 0.0
    %131 = vmatprep.subr.mxu0 0.0
    %132 = vmatpush2.msra.mxu0 0.0
    %133 = vmatprep.subr.mxu0 0.0
    %134 = vmatpush2.msra.mxu0 0.0
    %135 = vmatprep.subr.mxu0 0.0
    %136 = vmatpush2.msra.mxu0 0.0
    %137 = vmatprep.subr.mxu0 0.0
    %138 = vmatpush2.msra.mxu0 0.0
    %139 = vmatprep.subr.mxu0 0.0
    %140 = vmatpush2.msra.mxu0 0.0
    %141 = vmatprep.subr.mxu0 0.0
    %142 = vmatpush2.msra.mxu0 0.0
    %143 = vmatprep.subr.mxu0 0.0
    %144 = vmatpush2.msra.mxu0 0.0
    %145 = vmatprep.subr.mxu0 0.0
    %146 = vmatpush2.msra.mxu0 0.0
    %147 = vmatprep.subr.mxu0 0.0
    %148 = vmatpush2.msra.mxu0 0.0
    %149 = vmatprep.subr.mxu0 0.0
    %150 = vmatpush2.msra.mxu0 0.0
    %151 = vmatprep.subr.mxu0 0.0
    %152 = vmatpush2.msra.mxu0 0.0
    %153 = vmatprep.subr.mxu0 0.0
    %154 = vmatpush2.msra.mxu0 0.0
    %155 = vmatprep.subr.mxu0 0.0
    %156 = vmatpush2.msra.mxu0 0.0
    %157 = vmatprep.subr.mxu0 0.0
    %158 = vmatpush2.msra.mxu0 0.0
    %159 = vmatprep.mubr.f32.mxu0 0.0
    %160 = vmatmul.mubr.f32.gmra.mxu0 %v71
    %v161 = vpop.f32.mrf.mxu0
    %v162 = vadd.f32 %v93, %v161
    %v163 = vpop.f32.mrf.mxu0
    %164 = vdwg.mxu0
    %v165 = vmax.f32 %v162, 0.0
    %v166 = vld [vmem:[#allocation5] sm:$0xff]
    %v167 = vld [vmem:[#allocation5 + $0x8] sm:$0xff]
    %v168 = vld [vmem:[#allocation5 + $0x10] sm:$0xff]
    %v169 = vld [vmem:[#allocation5 + $0x18] sm:$0xff]
    %v170 = vld [vmem:[#allocation5 + $0x20] sm:$0xff]
    %v171 = vld [vmem:[#allocation5 + $0x28] sm:$0xff]
    %v172 = vld [vmem:[#allocation5 + $0x30] sm:$0xff]
    %v173 = vld [vmem:[#allocation5 + $0x38] sm:$0xff]
    %v174 = vld [vmem:[#allocation5 + $0x40] sm:$0xff]
    %v175 = vld [vmem:[#allocation5 + $0x48] sm:$0xff]
    %v176 = vld [vmem:[#allocation5 + $0x50] sm:$0xff]
    %v177 = vld [vmem:[#allocation5 + $0x58] sm:$0xff]
    %v178 = vld [vmem:[#allocation5 + $0x60] sm:$0xff]
    %v179 = vld [vmem:[#allocation5 + $0x68] sm:$0xff]
    %v180 = vld [vmem:[#allocation5 + $0x70] sm:$0xff]
    %v181 = vld [vmem:[#allocation5 + $0x78] sm:$0xff]
    %v182 = vld [vmem:[%s4] sm:$0x1]
    %v184 = vlaneseq
    %v185 = vshrl.u32 %v184, 7
    %v186 = vsub.s32 0, %v185
    %v187 = vrot.slane %v182, %v186
    %189 = vmatprep.subr.mxu0 0.0
    %190 = vmatpush1.msra.mxu0 %v181
    %191 = vmatprep.subr.mxu0 0.0
    %192 = vmatpush1.msra.mxu0 %v180
    %193 = vmatprep.subr.mxu0 0.0
    %194 = vmatpush1.msra.mxu0 %v179
    %195 = vmatprep.subr.mxu0 0.0
    %196 = vmatpush1.msra.mxu0 %v178
    %197 = vmatprep.subr.mxu0 0.0
    %198 = vmatpush1.msra.mxu0 %v177
    %199 = vmatprep.subr.mxu0 0.0
    %200 = vmatpush1.msra.mxu0 %v176
    %201 = vmatprep.subr.mxu0 0.0
    %202 = vmatpush1.msra.mxu0 %v175
    %203 = vmatprep.subr.mxu0 0.0
    %204 = vmatpush1.msra.mxu0 %v174
    %205 = vmatprep.subr.mxu0 0.0
    %206 = vmatpush1.msra.mxu0 %v173
    %207 = vmatprep.subr.mxu0 0.0
    %208 = vmatpush1.msra.mxu0 %v172
    %209 = vmatprep.subr.mxu0 0.0
    %210 = vmatpush1.msra.mxu0 %v171
    %211 = vmatprep.subr.mxu0 0.0
    %212 = vmatpush1.msra.mxu0 %v170
    %213 = vmatprep.subr.mxu0 0.0
    %214 = vmatpush1.msra.mxu0 %v169
    %215 = vmatprep.subr.mxu0 0.0
    %216 = vmatpush1.msra.mxu0 %v168
    %217 = vmatprep.subr.mxu0 0.0
    %218 = vmatpush1.msra.mxu0 %v167
    %219 = vmatprep.subr.mxu0 0.0
    %220 = vmatpush1.msra.mxu0 %v166
    %221 = vmatprep.subr.mxu0 0.0
    %222 = vmatpush2.msra.mxu0 0.0
    %223 = vmatprep.subr.mxu0 0.0
    %224 = vmatpush2.msra.mxu0 0.0
    %225 = vmatprep.subr.mxu0 0.0
    %226 = vmatpush2.msra.mxu0 0.0
    %227 = vmatprep.subr.mxu0 0.0
    %228 = vmatpush2.msra.mxu0 0.0
    %229 = vmatprep.subr.mxu0 0.0
    %230 = vmatpush2.msra.mxu0 0.0
    %231 = vmatprep.subr.mxu0 0.0
    %232 = vmatpush2.msra.mxu0 0.0
    %233 = vmatprep.subr.mxu0 0.0
    %234 = vmatpush2.msra.mxu0 0.0
    %235 = vmatprep.subr.mxu0 0.0
    %236 = vmatpush2.msra.mxu0 0.0
    %237 = vmatprep.subr.mxu0 0.0
    %238 = vmatpush2.msra.mxu0 0.0
    %239 = vmatprep.subr.mxu0 0.0
    %240 = vmatpush2.msra.mxu0 0.0
    %241 = vmatprep.subr.mxu0 0.0
    %242 = vmatpush2.msra.mxu0 0.0
    %243 = vmatprep.subr.mxu0 0.0
    %244 = vmatpush2.msra.mxu0 0.0
    %245 = vmatprep.subr.mxu0 0.0
    %246 = vmatpush2.msra.mxu0 0.0
    %247 = vmatprep.subr.mxu0 0.0
    %248 = vmatpush2.msra.mxu0 0.0
    %249 = vmatprep.subr.mxu0 0.0
    %250 = vmatpush2.msra.mxu0 0.0
    %251 = vmatprep.subr.mxu0 0.0
    %252 = vmatpush2.msra.mxu0 0.0
    %253 = vmatprep.mubr.f32.mxu0 0.0
    %254 = vmatmul.mubr.f32.gmra.mxu0 %v165
    %v255 = vpop.f32.mrf.mxu0
    %v256 = vadd.f32 %v187, %v255
    %v257 = vpop.f32.mrf.mxu0
    %258 = vdwg.mxu0
    %v259 = vmax.f32 %v256, 0.0
    %v260 = vld [vmem:[#allocation7] sm:$0xff]
    %v261 = vld [vmem:[#allocation7 + $0x8] sm:$0xff]
    %v262 = vld [vmem:[#allocation7 + $0x10] sm:$0xff]
    %v263 = vld [vmem:[#allocation7 + $0x18] sm:$0xff]
    %v264 = vld [vmem:[#allocation7 + $0x20] sm:$0xff]
    %v265 = vld [vmem:[#allocation7 + $0x28] sm:$0xff]
    %v266 = vld [vmem:[#allocation7 + $0x30] sm:$0xff]
    %v267 = vld [vmem:[#allocation7 + $0x38] sm:$0xff]
    %v268 = vld [vmem:[#allocation7 + $0x40] sm:$0xff]
    %v269 = vld [vmem:[#allocation7 + $0x48] sm:$0xff]
    %v270 = vld [vmem:[#allocation7 + $0x50] sm:$0xff]
    %v271 = vld [vmem:[#allocation7 + $0x58] sm:$0xff]
    %v272 = vld [vmem:[#allocation7 + $0x60] sm:$0xff]
    %v273 = vld [vmem:[#allocation7 + $0x68] sm:$0xff]
    %v274 = vld [vmem:[#allocation7 + $0x70] sm:$0xff]
    %v275 = vld [vmem:[#allocation7 + $0x78] sm:$0xff]
    %v276 = vld [vmem:[%s6] sm:$0x1]
    %v278 = vlaneseq
    %v279 = vshrl.u32 %v278, 7
    %v280 = vsub.s32 0, %v279
    %v281 = vrot.slane %v276, %v280
    %283 = vmatprep.subr.mxu0 0.0
    %284 = vmatpush1.msra.mxu0 %v275
    %285 = vmatprep.subr.mxu0 0.0
    %286 = vmatpush1.msra.mxu0 %v274
    %287 = vmatprep.subr.mxu0 0.0
    %288 = vmatpush1.msra.mxu0 %v273
    %289 = vmatprep.subr.mxu0 0.0
    %290 = vmatpush1.msra.mxu0 %v272
    %291 = vmatprep.subr.mxu0 0.0
    %292 = vmatpush1.msra.mxu0 %v271
    %293 = vmatprep.subr.mxu0 0.0
    %294 = vmatpush1.msra.mxu0 %v270
    %295 = vmatprep.subr.mxu0 0.0
    %296 = vmatpush1.msra.mxu0 %v269
    %297 = vmatprep.subr.mxu0 0.0
    %298 = vmatpush1.msra.mxu0 %v268
    %299 = vmatprep.subr.mxu0 0.0
    %300 = vmatpush1.msra.mxu0 %v267
    %301 = vmatprep.subr.mxu0 0.0
    %302 = vmatpush1.msra.mxu0 %v266
    %303 = vmatprep.subr.mxu0 0.0
    %304 = vmatpush1.msra.mxu0 %v265
    %305 = vmatprep.subr.mxu0 0.0
    %306 = vmatpush1.msra.mxu0 %v264
    %307 = vmatprep.subr.mxu0 0.0
    %308 = vmatpush1.msra.mxu0 %v263
    %309 = vmatprep.subr.mxu0 0.0
    %310 = vmatpush1.msra.mxu0 %v262
    %311 = vmatprep.subr.mxu0 0.0
    %312 = vmatpush1.msra.mxu0 %v261
    %313 = vmatprep.subr.mxu0 0.0
    %314 = vmatpush1.msra.mxu0 %v260
    %315 = vmatprep.subr.mxu0 0.0
    %316 = vmatpush2.msra.mxu0 0.0
    %317 = vmatprep.subr.mxu0 0.0
    %318 = vmatpush2.msra.mxu0 0.0
    %319 = vmatprep.subr.mxu0 0.0
    %320 = vmatpush2.msra.mxu0 0.0
    %321 = vmatprep.subr.mxu0 0.0
    %322 = vmatpush2.msra.mxu0 0.0
    %323 = vmatprep.subr.mxu0 0.0
    %324 = vmatpush2.msra.mxu0 0.0
    %325 = vmatprep.subr.mxu0 0.0
    %326 = vmatpush2.msra.mxu0 0.0
    %327 = vmatprep.subr.mxu0 0.0
    %328 = vmatpush2.msra.mxu0 0.0
    %329 = vmatprep.subr.mxu0 0.0
    %330 = vmatpush2.msra.mxu0 0.0
    %331 = vmatprep.subr.mxu0 0.0
    %332 = vmatpush2.msra.mxu0 0.0
    %333 = vmatprep.subr.mxu0 0.0
    %334 = vmatpush2.msra.mxu0 0.0
    %335 = vmatprep.subr.mxu0 0.0
    %336 = vmatpush2.msra.mxu0 0.0
    %337 = vmatprep.subr.mxu0 0.0
    %338 = vmatpush2.msra.mxu0 0.0
    %339 = vmatprep.subr.mxu0 0.0
    %340 = vmatpush2.msra.mxu0 0.0
    %341 = vmatprep.subr.mxu0 0.0
    %342 = vmatpush2.msra.mxu0 0.0
    %343 = vmatprep.subr.mxu0 0.0
    %344 = vmatpush2.msra.mxu0 0.0
    %345 = vmatprep.subr.mxu0 0.0
    %346 = vmatpush2.msra.mxu0 0.0
    %347 = vmatprep.mubr.f32.mxu0 0.0
    %348 = vmatmul.mubr.f32.gmra.mxu0 %v259
    %v349 = vpop.f32.mrf.mxu0
    %v350 = vadd.f32 %v281, %v349
    %v351 = vpop.f32.mrf.mxu0
    %352 = vdwg.mxu0
    %353 = vst.msk [vmem:[%s7] sm:$0xff] %vm69, %v350
    // Predicated region
    $region42: #{_mlp_flow_forward_2d.1} parent=1 // pred_check
      _
    $region43: #{_mlp_flow_forward_2d.1} parent=1 // pred_check_branch
      %355 = sbr.rel (0) target = $region45
    $region44: #{_mlp_flow_forward_2d.1} parent=1 // pred_region
      _
    $region45: #{_mlp_flow_forward_2d.1} parent=1 // pred_fallthru
      _
    // Predicated region
    $region46: #{_mlp_flow_forward_2d.1} parent=1 // pred_check
      _
    $region47: #{_mlp_flow_forward_2d.1} parent=1 // pred_check_branch
      %357 = sbr.rel (0) target = $region49
    $region48: #{_mlp_flow_forward_2d.1} parent=1 // pred_region
      _
    $region49: #{_mlp_flow_forward_2d.1} parent=1 // pred_fallthru
      _
    %358 = vsyncpa [#allocation4], 1
    %359 = vsyncpa [#allocation6], 1

</llo_original>
